<compile_context>
chip_gen: v6e
topology: v6e:2x2x1
jax: 0.10.0
libtpu: 0.0.40
codegen_flags: <defaults>
</compile_context>

<pallas_src>
import functools

import jax
import jax.numpy as jnp
from jax.experimental import pallas as pl
from jax.experimental.pallas import tpu as pltpu


def _round_up(a, b):
    return (a + b - 1) // b * b


def _vmem_capacity_bytes():
    """Physical VMEM per TensorCore (v5e/v6e: 128 MiB, v7x: 64 MiB)."""
    try:
        info = pltpu.get_tpu_info()
        cap = int(getattr(info, "vmem_capacity_bytes", 0))
        if cap > 0:
            return cap
    except Exception:
        pass
    return 64 << 20  # conservative default (v7x-sized) if the query is unavailable


# --------------------------------------------------------------------------------------
# Fused single-pass kernel: whole (C, HW) slab per grid step (HW may be ragged).
# --------------------------------------------------------------------------------------
def _ada_iln_fused_kernel(x_ref, sb_ref, o_ref, *, hw, c, eps):
    # x_ref : (1, C, HW) native dtype; sb_ref: (1, C, 4) f32 = [gamma, beta, rho0, rho1]
    x = x_ref[0].astype(jnp.float32)                       # (C, HW)

    # Per-channel mean (one reduce pass over VMEM-resident data).
    s = jnp.sum(x, axis=1, keepdims=True)                  # (C, 1)
    in_mean = s * (1.0 / hw)

    # Centered sum of squares -> numerically stable unbiased variance (matches torch.var).
    d = x - in_mean
    ss = jnp.sum(d * d, axis=1, keepdims=True)             # (C, 1)
    in_var = ss * (1.0 / max(hw - 1, 1))
    inv_in = jax.lax.rsqrt(in_var + eps)                   # (C, 1), EUP

    # Layer-norm stats derived exactly from the per-channel centered partials.
    tot = c * hw
    ln_mean = jnp.sum(s) * (1.0 / tot)                     # scalar
    dm = in_mean - ln_mean                                 # (C, 1)
    ln_var = (jnp.sum(ss) + hw * jnp.sum(dm * dm)) * (1.0 / max(tot - 1, 1))
    inv_ln = jax.lax.rsqrt(ln_var + eps)                   # scalar

    sb = sb_ref[0]                                         # (C, 4) f32
    gamma = sb[:, 0:1]
    beta = sb[:, 1:2]
    rho0 = sb[:, 2:3]
    rho1 = sb[:, 3:4]

    # Fold IN + LN + rho mix + gamma/beta into one per-channel affine -> single FMA pass.
    scale = gamma * (rho0 * inv_in + rho1 * inv_ln)                            # (C, 1)
    bias = beta - gamma * (rho0 * inv_in * in_mean + rho1 * inv_ln * ln_mean)  # (C, 1)

    o_ref[0] = (x * scale + bias).astype(o_ref.dtype)


# --------------------------------------------------------------------------------------
# Tiled two-pass path: stats kernel (scratch accumulators) + apply kernel (pure affine).
# --------------------------------------------------------------------------------------
def _ada_iln_stats_kernel(x_ref, o_ref, s_acc, sq_acc, *, hw, tile):
    # x_ref: (1, C, T) native dtype; o_ref: (1, C, 2) f32 written only on the last tile.
    t = pl.program_id(1)

    @pl.when(t == 0)
    def _():
        s_acc[...] = jnp.zeros_like(s_acc)
        sq_acc[...] = jnp.zeros_like(sq_acc)

    x = x_ref[0].astype(jnp.float32)                       # (C, T)
    valid = hw - t * tile                                  # >= tile except possibly last

    @pl.when(valid >= tile)
    def _():
        s_acc[...] += jnp.sum(x, axis=1, keepdims=True)
        sq_acc[...] += jnp.sum(x * x, axis=1, keepdims=True)

    @pl.when(valid < tile)
    def _():
        # Ragged last tile: mask the out-of-bounds lanes (their contents are garbage).
        lane = jax.lax.broadcasted_iota(jnp.int32, x.shape, 1)
        xm = jnp.where(lane < valid, x, 0.0)
        s_acc[...] += jnp.sum(xm, axis=1, keepdims=True)
        sq_acc[...] += jnp.sum(xm * xm, axis=1, keepdims=True)

    @pl.when(t == pl.num_programs(1) - 1)
    def _():
        o_ref[0] = jnp.concatenate([s_acc[...], sq_acc[...]], axis=1)


def _ada_iln_apply_kernel(x_ref, sb_ref, o_ref):
    # x_ref: (1, C, T) native dtype; sb_ref: (1, C, 2) f32 = [scale, bias]
    x = x_ref[0].astype(jnp.float32)
    sb = sb_ref[0]                                         # (C, 2)
    # Ragged last tile computes garbage past HW; Pallas drops the OOB writeback.
    o_ref[0] = (x * sb[:, 0:1] + sb[:, 1:2]).astype(o_ref.dtype)


# --------------------------------------------------------------------------------------
# Wrapper
# --------------------------------------------------------------------------------------
def ada_iln_forward(x_nchw, gamma, beta, rho, eps=1e-5,
                    max_fused_bytes=None, tile_hw=None):
    """adaILN forward (using_bn=False).

    x_nchw: (N, C, H, W)  any float dtype (output keeps this dtype)
    gamma, beta: (N, C)
    rho: (1, C, 2) raw parameter (softmax over last dim applied here)
    """
    N, C, H, W = x_nchw.shape
    HW = H * W
    in_dtype = x_nchw.dtype
    itemsize = jnp.dtype(in_dtype).itemsize

    x = x_nchw.reshape(N, C, HW)                           # metadata-only reshape

    # Parameter glue on tiny arrays (plain JAX): softmax of rho, f32 params.
    rho_sm = jax.nn.softmax(rho.astype(jnp.float32), axis=2)          # (1, C, 2)
    rho0 = jnp.broadcast_to(rho_sm[:, :, 0], (N, C))
    rho1 = jnp.broadcast_to(rho_sm[:, :, 1], (N, C))
    g32 = gamma.astype(jnp.float32)
    b32 = beta.astype(jnp.float32)

    # ---- generation-aware VMEM budgets ------------------------------------------------
    vmem_cap = _vmem_capacity_bytes()            # 128 MiB (v5e/v6e) or 64 MiB (v7x)
    vmem_limit = int(vmem_cap * 0.70)            # explicit scoped-VMEM request, ~25-30% headroom
    if max_fused_bytes is None:
        max_fused_bytes = int(vmem_cap * 0.45)   # ~56 MiB on 128 MiB parts, ~28 MiB on v7x
    two_tc = vmem_cap <= (64 << 20)              # heuristic: v7x = 64 MiB VMEM, 2 TCs/chip

    # Fused footprint: double-buffered native in/out (4*itemsize) plus f32 temporaries
    # (f32 copy, centered diff, pre-cast result ~ 20 B/elem), sublane-padded C,
    # lane-padded HW (VMEM tiles are padded internally even though HBM is not).
    c_eff = _round_up(C, 8)
    hwp128 = _round_up(HW, 128)
    fused_bytes = c_eff * hwp128 * (4 * itemsize + 20)

    use_fused = (tile_hw is None
                 and fused_bytes <= max_fused_bytes
                 and not (two_tc and N < 2))     # keep both v7x TensorCores busy when N == 1

    if use_fused:
        # ---------------- fused single-pass path (2 HBM passes total) ----------------
        sb = jnp.stack([g32, b32, rho0, rho1], axis=-1)               # (N, C, 4) f32
        out = pl.pallas_call(
            functools.partial(_ada_iln_fused_kernel, hw=HW, c=C, eps=eps),
            out_shape=jax.ShapeDtypeStruct((N, C, HW), in_dtype),
            grid_spec=pltpu.PrefetchScalarGridSpec(
                num_scalar_prefetch=0,
                grid=(N,),
                in_specs=[
                    pl.BlockSpec((1, C, HW), lambda n: (n, 0, 0)),    # full-extent slab
                    pl.BlockSpec((1, C, 4), lambda n: (n, 0, 0)),     # stacked params
                ],
                out_specs=pl.BlockSpec((1, C, HW), lambda n: (n, 0, 0)),
            ),
            compiler_params=pltpu.CompilerParams(
                dimension_semantics=("parallel",),
                vmem_limit_bytes=vmem_limit),
        )(x, sb)
        return out.reshape(N, C, H, W)

    # ---------------- tiled two-pass path (large slabs / small N on v7x) ----------------
    if tile_hw is not None:
        assert tile_hw % 128 == 0, "tile_hw must be a multiple of 128"
        T = tile_hw
    else:
        tile_budget = int(vmem_cap * 0.22)       # ~28 MiB on 128 MiB parts, ~14 MiB on v7x
        per_lane = c_eff * (4 * itemsize + 12)   # dbl-buffered in/out + f32 temporaries
        T = (tile_budget // per_lane) // 128 * 128
        T = max(512, min(T, 16384))
    T = min(T, hwp128)
    num_tiles = pl.cdiv(HW, T)                   # no wrapper-side padding; last tile ragged

    # Pass 1: per-(n, c) sum / sumsq accumulated across HW tiles in VMEM scratch.
    # TODO(synk): very large |mean| activations could still suffer E[x^2]-E[x]^2
    # cancellation on this (tiled) path; a shifted/compensated accumulation would need
    # an extra HBM read which costs more than it saves for this memory-bound op.
    sums = pl.pallas_call(
        functools.partial(_ada_iln_stats_kernel, hw=HW, tile=T),
        out_shape=jax.ShapeDtypeStruct((N, C, 2), jnp.float32),
        grid_spec=pltpu.PrefetchScalarGridSpec(
            num_scalar_prefetch=0,
            grid=(N, num_tiles),
            in_specs=[pl.BlockSpec((1, C, T), lambda n, t: (n, 0, t))],
            out_specs=pl.BlockSpec((1, C, 2), lambda n, t: (n, 0, 0)),
            scratch_shapes=[pltpu.VMEM((C, 1), jnp.float32),
                            pltpu.VMEM((C, 1), jnp.float32)],
        ),
        compiler_params=pltpu.CompilerParams(
            dimension_semantics=("parallel", "arbitrary"),
            vmem_limit_bytes=vmem_limit),
    )(x)

    # Tiny (N, C) glue in plain JAX: derive stats and the fused per-channel affine.
    s = sums[..., 0]
    sq = sums[..., 1]
    in_mean = s / HW
    in_var = (sq - in_mean * s) / max(HW - 1, 1)
    inv_in = jax.lax.rsqrt(in_var + eps)                              # (N, C)
    s_all = jnp.sum(s, axis=1, keepdims=True)
    sq_all = jnp.sum(sq, axis=1, keepdims=True)
    ln_mean = s_all / (C * HW)
    ln_var = (sq_all - ln_mean * s_all) / max(C * HW - 1, 1)
    inv_ln = jax.lax.rsqrt(ln_var + eps)                              # (N, 1)

    scale = g32 * (rho0 * inv_in + rho1 * inv_ln)
    bias = b32 - g32 * (rho0 * inv_in * in_mean + rho1 * inv_ln * ln_mean)
    sb = jnp.stack([scale, bias], axis=-1)                            # (N, C, 2) f32

    # Pass 2: fully-parallel affine apply (feeds both v7x TensorCores).
    out = pl.pallas_call(
        _ada_iln_apply_kernel,
        out_shape=jax.ShapeDtypeStruct((N, C, HW), in_dtype),
        grid_spec=pltpu.PrefetchScalarGridSpec(
            num_scalar_prefetch=0,
            grid=(N, num_tiles),
            in_specs=[
                pl.BlockSpec((1, C, T), lambda n, t: (n, 0, t)),
                pl.BlockSpec((1, C, 2), lambda n, t: (n, 0, 0)),
            ],
            out_specs=pl.BlockSpec((1, C, T), lambda n, t: (n, 0, t)),
        ),
        compiler_params=pltpu.CompilerParams(
            dimension_semantics=("parallel", "parallel"),
            vmem_limit_bytes=vmem_limit),
    )(x, sb)
    return out.reshape(N, C, H, W)


# --------------------------------------------------------------------------------------
# Pure-JAX reference mirroring the PyTorch forward (using_bn=False).
# --------------------------------------------------------------------------------------
def ada_iln_reference(x, gamma, beta, rho, eps=1e-5):
    x = x.astype(jnp.float32)
    N, C, H, W = x.shape
    in_mean = jnp.mean(x, axis=(2, 3), keepdims=True)
    in_var = jnp.sum((x - in_mean) ** 2, axis=(2, 3), keepdims=True) / (H * W - 1)
    out_in = (x - in_mean) / jnp.sqrt(in_var + eps)
    ln_mean = jnp.mean(x, axis=(1, 2, 3), keepdims=True)
    ln_var = jnp.sum((x - ln_mean) ** 2, axis=(1, 2, 3), keepdims=True) / (C * H * W - 1)
    out_ln = (x - ln_mean) / jnp.sqrt(ln_var + eps)
    rho_sm = jax.nn.softmax(rho.astype(jnp.float32), axis=2)
    rho0 = rho_sm[:, :, 0].reshape(1, C, 1, 1)
    rho1 = rho_sm[:, :, 1].reshape(1, C, 1, 1)
    out = rho0 * out_in + rho1 * out_ln
    return out * gamma.astype(jnp.float32)[:, :, None, None] + \
        beta.astype(jnp.float32)[:, :, None, None]


# TODO(synk): the using_bn=True branch (running_mean/running_var buffer updates in
# training mode) mutates module state and is not implemented here.

if __name__ == "__main__":
    key = jax.random.PRNGKey(0)

    def make_inputs(N, C, H, W, dtype):
        k = jax.random.fold_in(key, H * W + C)
        kx, kg, kb = jax.random.split(k, 3)
        x = jax.random.normal(kx, (N, C, H, W), jnp.float32).astype(dtype)
        gamma = jax.random.normal(kg, (N, C), jnp.float32).astype(dtype)
        beta = jax.random.normal(kb, (N, C), jnp.float32).astype(dtype)
        return x, gamma, beta

    def make_rho(C):
        # adaILN.__init__ (using_bn=False): rho[..., 0] = 3.2, rho[..., 1] = 1.0
        return jnp.stack(
            [jnp.full((1, C), 3.2, jnp.float32), jnp.full((1, C), 1.0, jnp.float32)],
            axis=2,
        )

    # 1) Fused path, lane-aligned spatial (N, C, H, W) = (2, 4, 16, 16).
    N, C, H, W = 2, 4, 16, 16
    rho = make_rho(C)
    x, gamma, beta = make_inputs(N, C, H, W, jnp.float32)
    out = jax.block_until_ready(ada_iln_forward(x, gamma, beta, rho))
    ref = ada_iln_reference(x, gamma, beta, rho)
    assert out.shape == (N, C, H, W) and out.dtype == jnp.float32
    assert jnp.allclose(out, ref, atol=2e-4, rtol=2e-4), "fused path mismatch"

    # 2) Fused path with a ragged spatial dim (14x14 = 196 lanes, no wrapper padding).
    x2, g2, b2 = make_inputs(2, 4, 14, 14, jnp.float32)
    out2 = jax.block_until_ready(ada_iln_forward(x2, g2, b2, rho))
    ref2 = ada_iln_reference(x2, g2, b2, rho)
    assert jnp.allclose(out2, ref2, atol=2e-4, rtol=2e-4), "ragged fused path mismatch"

    # 3) Tiled two-pass path (forced), 128-lane tiles on an aligned input.
    out3 = jax.block_until_ready(
        ada_iln_forward(x, gamma, beta, rho, max_fused_bytes=0, tile_hw=128))
    assert jnp.allclose(out3, ref, atol=2e-4, rtol=2e-4), "tiled path mismatch"

    # 4) Tiled path with a ragged last tile (HW = 196, T = 128 -> valid tail of 68).
    out4 = jax.block_until_ready(
        ada_iln_forward(x2, g2, b2, rho, max_fused_bytes=0, tile_hw=128))
    assert jnp.allclose(out4, ref2, atol=2e-4, rtol=2e-4), "ragged tiled path mismatch"

    # 5) bf16 I/O smoke test (native-dtype in/out, f32 math inside the kernel).
    xb, gb, bb = make_inputs(N, C, H, W, jnp.bfloat16)
    outb = jax.block_until_ready(ada_iln_forward(xb, gb, bb, rho))
    refb = ada_iln_reference(xb, gb, bb, rho)
    assert outb.dtype == jnp.bfloat16
    assert jnp.allclose(outb.astype(jnp.float32), refb, atol=8e-2, rtol=8e-2), \
        "bf16 path mismatch"

    print("KERNEL_OK")
</pallas_src>

<mosaic_0001>
module attributes {stable_mosaic.version = 11 : i64} {
  func.func @_ada_iln_fused_kernel(%arg0: i32, %arg1: memref<1x4x256xf32, #tpu.memory_space<vmem>>, %arg2: memref<1x4x4xf32, #tpu.memory_space<vmem>>, %arg3: memref<1x4x256xf32, #tpu.memory_space<vmem>>) attributes {dimension_semantics = [#tpu.dimension_semantics<parallel>], iteration_bounds = array<i64: 2>, scalar_prefetch = 0 : i64, scratch_operands = 0 : i64, tpu.core_type = #tpu.core_type<tc>, window_params = [{transform_indices = @transform_0, window_bounds = array<i64: 1, 4, 256>}, {transform_indices = @transform_1, window_bounds = array<i64: 1, 4, 4>}, {transform_indices = @transform_2, window_bounds = array<i64: 1, 4, 256>}]} {
    %c0 = arith.constant 0 : index
    %c0_0 = arith.constant 0 : index
    %c0_1 = arith.constant 0 : index
    %0 = vector.load %arg1[%c0, %c0_0, %c0_1] : memref<1x4x256xf32, #tpu.memory_space<vmem>>, vector<1x4x256xf32>
    %1 = vector.shape_cast %0 : vector<1x4x256xf32> to vector<4x256xf32>
    %cst = arith.constant dense<0.000000e+00> : vector<4xf32>
    %2 = vector.multi_reduction <add>, %1, %cst [1] : vector<4x256xf32> to vector<4xf32>
    %3 = vector.shape_cast %2 : vector<4xf32> to vector<4x1xf32>
    %cst_2 = arith.constant 3.906250e-03 : f32
    %4 = vector.broadcast %cst_2 : f32 to vector<4x1xf32>
    %5 = arith.mulf %3, %4 : vector<4x1xf32>
    %6 = vector.broadcast %5 : vector<4x1xf32> to vector<4x256xf32>
    %7 = arith.subf %1, %6 : vector<4x256xf32>
    %8 = arith.mulf %7, %7 : vector<4x256xf32>
    %cst_3 = arith.constant dense<0.000000e+00> : vector<4xf32>
    %9 = vector.multi_reduction <add>, %8, %cst_3 [1] : vector<4x256xf32> to vector<4xf32>
    %10 = vector.shape_cast %9 : vector<4xf32> to vector<4x1xf32>
    %cst_4 = arith.constant 0.00392156886 : f32
    %11 = vector.broadcast %cst_4 : f32 to vector<4x1xf32>
    %12 = arith.mulf %10, %11 : vector<4x1xf32>
    %cst_5 = arith.constant 9.99999974E-6 : f32
    %13 = vector.broadcast %cst_5 : f32 to vector<4x1xf32>
    %14 = arith.addf %12, %13 : vector<4x1xf32>
    %15 = math.rsqrt %14 : vector<4x1xf32>
    %16 = vector.shape_cast %3 : vector<4x1xf32> to vector<1x4x1xf32>
    %cst_6 = arith.constant dense<0.000000e+00> : vector<1xf32>
    %17 = vector.multi_reduction <add>, %16, %cst_6 [1, 2] : vector<1x4x1xf32> to vector<1xf32>
    %18 = vector.shape_cast %17 : vector<1xf32> to vector<1x1x1xf32>
    %19 = vector.extract %18[0, 0, 0] : f32 from vector<1x1x1xf32>
    %cst_7 = arith.constant 9.765625E-4 : f32
    %20 = arith.mulf %19, %cst_7 : f32
    %21 = vector.broadcast %20 : f32 to vector<4x1xf32>
    %22 = arith.subf %5, %21 : vector<4x1xf32>
    %23 = vector.shape_cast %10 : vector<4x1xf32> to vector<1x4x1xf32>
    %cst_8 = arith.constant dense<0.000000e+00> : vector<1xf32>
    %24 = vector.multi_reduction <add>, %23, %cst_8 [1, 2] : vector<1x4x1xf32> to vector<1xf32>
    %25 = vector.shape_cast %24 : vector<1xf32> to vector<1x1x1xf32>
    %26 = vector.extract %25[0, 0, 0] : f32 from vector<1x1x1xf32>
    %27 = arith.mulf %22, %22 : vector<4x1xf32>
    %28 = vector.shape_cast %27 : vector<4x1xf32> to vector<1x4x1xf32>
    %cst_9 = arith.constant dense<0.000000e+00> : vector<1xf32>
    %29 = vector.multi_reduction <add>, %28, %cst_9 [1, 2] : vector<1x4x1xf32> to vector<1xf32>
    %30 = vector.shape_cast %29 : vector<1xf32> to vector<1x1x1xf32>
    %31 = vector.extract %30[0, 0, 0] : f32 from vector<1x1x1xf32>
    %cst_10 = arith.constant 2.560000e+02 : f32
    %32 = arith.mulf %cst_10, %31 : f32
    %33 = arith.addf %26, %32 : f32
    %cst_11 = arith.constant 9.77517105E-4 : f32
    %34 = arith.mulf %33, %cst_11 : f32
    %cst_12 = arith.constant 9.99999974E-6 : f32
    %35 = arith.addf %34, %cst_12 : f32
    %36 = math.rsqrt %35 : f32
    %c0_13 = arith.constant 0 : index
    %c0_14 = arith.constant 0 : index
    %c0_15 = arith.constant 0 : index
    %37 = vector.load %arg2[%c0_13, %c0_14, %c0_15] : memref<1x4x4xf32, #tpu.memory_space<vmem>>, vector<1x4x4xf32>
    %38 = vector.shape_cast %37 : vector<1x4x4xf32> to vector<4x4xf32>
    %39 = vector.extract_strided_slice %38 {offsets = [0, 0], sizes = [4, 1], strides = [1, 1]} : vector<4x4xf32> to vector<4x1xf32>
    %40 = vector.extract_strided_slice %38 {offsets = [0, 1], sizes = [4, 1], strides = [1, 1]} : vector<4x4xf32> to vector<4x1xf32>
    %41 = vector.extract_strided_slice %38 {offsets = [0, 2], sizes = [4, 1], strides = [1, 1]} : vector<4x4xf32> to vector<4x1xf32>
    %42 = vector.extract_strided_slice %38 {offsets = [0, 3], sizes = [4, 1], strides = [1, 1]} : vector<4x4xf32> to vector<4x1xf32>
    %43 = arith.mulf %41, %15 : vector<4x1xf32>
    %44 = vector.broadcast %36 : f32 to vector<4x1xf32>
    %45 = arith.mulf %42, %44 : vector<4x1xf32>
    %46 = arith.addf %43, %45 : vector<4x1xf32>
    %47 = arith.mulf %39, %46 : vector<4x1xf32>
    %48 = arith.mulf %41, %15 : vector<4x1xf32>
    %49 = arith.mulf %48, %5 : vector<4x1xf32>
    %50 = vector.broadcast %36 : f32 to vector<4x1xf32>
    %51 = arith.mulf %42, %50 : vector<4x1xf32>
    %52 = vector.broadcast %20 : f32 to vector<4x1xf32>
    %53 = arith.mulf %51, %52 : vector<4x1xf32>
    %54 = arith.addf %49, %53 : vector<4x1xf32>
    %55 = arith.mulf %39, %54 : vector<4x1xf32>
    %56 = arith.subf %40, %55 : vector<4x1xf32>
    %57 = vector.broadcast %47 : vector<4x1xf32> to vector<4x256xf32>
    %58 = arith.mulf %1, %57 : vector<4x256xf32>
    %59 = vector.broadcast %56 : vector<4x1xf32> to vector<4x256xf32>
    %60 = arith.addf %58, %59 : vector<4x256xf32>
    %c0_16 = arith.constant 0 : index
    %c0_17 = arith.constant 0 : index
    %c0_18 = arith.constant 0 : index
    %61 = vector.load %arg3[%c0_16, %c0_17, %c0_18] : memref<1x4x256xf32, #tpu.memory_space<vmem>>, vector<1x4x256xf32>
    %62 = vector.shape_cast %61 : vector<1x4x256xf32> to vector<4x256xf32>
    %63 = vector.shape_cast %60 : vector<4x256xf32> to vector<1x4x256xf32>
    tpu.vector_store %arg3[%c0_16, %c0_17, %c0_18], %63 {strides = array<i32>} : memref<1x4x256xf32, #tpu.memory_space<vmem>>, vector<1x4x256xf32>,
    return
  }
  func.func @transform_0(%arg0: i32) -> (i32, i32, i32) {
    %c0_i32 = arith.constant 0 : i32
    %c0_i32_0 = arith.constant 0 : i32
    %c0_i32_1 = arith.constant 0 : i32
    return %arg0, %c0_i32, %c0_i32_0 : i32, i32, i32
  }
  func.func @transform_1(%arg0: i32) -> (i32, i32, i32) {
    %c0_i32 = arith.constant 0 : i32
    %c0_i32_0 = arith.constant 0 : i32
    %c0_i32_1 = arith.constant 0 : i32
    return %arg0, %c0_i32, %c0_i32_0 : i32, i32, i32
  }
  func.func @transform_2(%arg0: i32) -> (i32, i32, i32) {
    %c0_i32 = arith.constant 0 : i32
    %c0_i32_0 = arith.constant 0 : i32
    %c0_i32_1 = arith.constant 0 : i32
    return %arg0, %c0_i32, %c0_i32_0 : i32, i32, i32
  }
}

</mosaic_0001>

<llo_original>
// kernel: tpu_custom_call.1
$region0: #{tpu_custom_call.1}
  #allocation0 [shape = 'u32[]', space=smem, size = 0x4, offset = 0x4, fixed_abs, tag = 'smem constant byte address 0x4 - core index']
  #allocation1 [shape = 'u32[144,128]{1,0:T(1,128)}', space=vmem, size = 0x12000, scoped, tag = 'internal scratch']
  %s0 = inlined_call_operand.hbm [shape: f32[2,4,256], index: 0, kind: input, shape index: {}]
  %s1 = inlined_call_operand.hbm [shape: f32[2,4,4], index: 1, kind: input, shape index: {}]
  %s2 = inlined_call_operand.hbm [shape: f32[2,4,256], index: 2, kind: output, shape index: {}]
  %s3 = sld [smem:[#allocation0]]
  $region49: #{tpu_custom_call.1} parent=0
    _
  %s5 = ssub.s32 1, %s3
  %s6 = scalar_select 0, %s5, %s3
  $region1: #{tpu_custom_call.1} parent=0
    #allocation2 [shape = 'u8[8192]{0}', space=vmem, size = 0x2000, scoped, tag = 'input window, operand 0']
    #allocation3 [shape = 's32[2]{0}', space=sflag, size = 0x8, scoped, tag = 'scoped memory for tpu_custom_call.1']
    #allocation4 [shape = 's32[2]{0}', space=sflag, size = 0x8, scoped, tag = 'scoped memory for tpu_custom_call.1']
    #allocation5 [shape = 'u8[4096]{0}', space=vmem, size = 0x1000, scoped, tag = 'input window, operand 1']
    #allocation6 [shape = 's32[2]{0}', space=sflag, size = 0x8, scoped, tag = 'scoped memory for tpu_custom_call.1']
    #allocation7 [shape = 'u8[8192]{0}', space=vmem, size = 0x2000, scoped, tag = 'output window, operand 0']
    %7 = vsyncpa [#allocation3], 0
    %s8 = scalar_lea.sflag [#allocation3], 1
    %9 = vsyncpa %s8, 0
    %10 = vsyncpa [#allocation6], 0
    %s11 = scalar_lea.sflag [#allocation6], 1
    %12 = vsyncpa %s11, 0
    %13 = vsyncpa [#allocation4], 0
    %s14 = scalar_lea.sflag [#allocation4], 1
    %15 = vsyncpa %s14, 0
    loop: start=0, step=1, limit=4
    $region2: #{tpu_custom_call.1} parent=1 // loop_pre_header
      _
    $region3: #{tpu_custom_call.1} parent=1 // loop_header
      %s17 = sphi 0, %s21
      %p18 = scmp.ge.s32.totalorder %s17, 4
      %s27 = sphi 0, %s29
      %s30 = sphi 0, %s27
      %s31 = sphi 0, %s30
      %s47 = sphi 0, %s31
      %s53 = sphi 0, %s55
      %s56 = sphi 0, %s53
      %s57 = sphi 0, %s56
      %s73 = sphi 0, %s57
      %s79 = sphi 0, %s81
      %s82 = sphi 0, %s79
      %s83 = sphi 0, %s82
      %s99 = sphi 0, %s83
    $region4: #{tpu_custom_call.1} parent=1 // loop_header_branch
      %20 = sbr.rel (%p18) target = $region8
    $region5: #{tpu_custom_call.1} parent=1 // loop_body
      %s22 = ssub.s32 %s17, 1
      %s23 = ssub.s32 %s17, 2
      %s24 = sadd.s32 %s17, 1
      %s25 = ssub.s32 %s17, %s24
      %p26 = scmp.eq.s32.totalorder %s25, 0
      %s28 = sadd.s32 %s27, 1
      %s29 = scalar_select %p26, %s27, %s28
      %p32 = pneg %p26
      %p33 = scmp.eq.s32.totalorder %s17, 1
      %p34 = por %p32, %p33
      %p35 = scmp.ne.s32.totalorder %s27, %s30
      %p36 = scmp.eq.s32.totalorder %s17, 0
      %p37 = por %p35, %p36
      %p38 = scmp.ne.s32.totalorder %s27, %s30
      %p39 = scmp.eq.s32.totalorder %s22, 1
      %p40 = por %p38, %p39
      %p41 = scmp.ne.s32.totalorder %s30, %s31
      %p42 = scmp.eq.s32.totalorder %s22, 0
      %p43 = por %p41, %p42
      %p44 = scmp.ne.s32.totalorder %s30, %s31
      %p45 = scmp.eq.s32.totalorder %s23, 1
      %p46 = por %p44, %p45
      %p48 = scmp.ne.s32.totalorder %s31, %s47
      %p49 = scmp.eq.s32.totalorder %s23, 0
      %p50 = por %p48, %p49
      %s51 = ssub.s32 %s17, %s24
      %p52 = scmp.eq.s32.totalorder %s51, 0
      %s54 = sadd.s32 %s53, 1
      %s55 = scalar_select %p52, %s53, %s54
      %p58 = pneg %p52
      %p59 = scmp.eq.s32.totalorder %s17, 1
      %p60 = por %p58, %p59
      %p61 = scmp.ne.s32.totalorder %s53, %s56
      %p62 = scmp.eq.s32.totalorder %s17, 0
      %p63 = por %p61, %p62
      %p64 = scmp.ne.s32.totalorder %s53, %s56
      %p65 = scmp.eq.s32.totalorder %s22, 1
      %p66 = por %p64, %p65
      %p67 = scmp.ne.s32.totalorder %s56, %s57
      %p68 = scmp.eq.s32.totalorder %s22, 0
      %p69 = por %p67, %p68
      %p70 = scmp.ne.s32.totalorder %s56, %s57
      %p71 = scmp.eq.s32.totalorder %s23, 1
      %p72 = por %p70, %p71
      %p74 = scmp.ne.s32.totalorder %s57, %s73
      %p75 = scmp.eq.s32.totalorder %s23, 0
      %p76 = por %p74, %p75
      %s77 = ssub.s32 %s17, %s24
      %p78 = scmp.eq.s32.totalorder %s77, 0
      %s80 = sadd.s32 %s79, 1
      %s81 = scalar_select %p78, %s79, %s80
      %p84 = pneg %p78
      %p85 = scmp.eq.s32.totalorder %s17, 1
      %p86 = por %p84, %p85
      %p87 = scmp.ne.s32.totalorder %s79, %s82
      %p88 = scmp.eq.s32.totalorder %s17, 0
      %p89 = por %p87, %p88
      %p90 = scmp.ne.s32.totalorder %s79, %s82
      %p91 = scmp.eq.s32.totalorder %s22, 1
      %p92 = por %p90, %p91
      %p93 = scmp.ne.s32.totalorder %s82, %s83
      %p94 = scmp.eq.s32.totalorder %s22, 0
      %p95 = por %p93, %p94
      %p96 = scmp.ne.s32.totalorder %s82, %s83
      %p97 = scmp.eq.s32.totalorder %s23, 1
      %p98 = por %p96, %p97
      %p100 = scmp.ne.s32.totalorder %s83, %s99
      %p101 = scmp.eq.s32.totalorder %s23, 0
      %p102 = por %p100, %p101
      %p103 = scmp.le.s32.totalorder 1, %s17
      %p104 = scmp.lt.s32.totalorder %s17, 3
      %p105 = pnand %p103, %p104
      %p106 = pneg %p105
      // Predicated region
      $region9: #{tpu_custom_call.1} parent=5 // pred_check
        _
      $region10: #{tpu_custom_call.1} parent=5 // pred_check_branch
        %108 = sbr.rel (%p105) target = $region12
      $region11: #{tpu_custom_call.1} parent=5 // pred_region
        %s109 = ssub.s32 %s17, 1
      $region12: #{tpu_custom_call.1} parent=5 // pred_fallthru
        _
      %p110 = scmp.lt.s32.totalorder %s17, 2
      // Predicated region
      $region13: #{tpu_custom_call.1} parent=5 // pred_check
        %p111 = pneg %p110
      $region14: #{tpu_custom_call.1} parent=5 // pred_check_branch
        %113 = sbr.rel (%p111) target = $region16
      $region15: #{tpu_custom_call.1} parent=5 // pred_region
        // Predicated region
        $region17: #{tpu_custom_call.1} parent=15 // pred_check
          %p114 = pneg %p37
        $region18: #{tpu_custom_call.1} parent=15 // pred_check_branch
          %116 = sbr.rel (%p114) target = $region20
        $region19: #{tpu_custom_call.1} parent=15 // pred_region
          %s117 = sand.u32 %s27, 1
          %s118 = scalar_lea.sflag [#allocation3], %s117
          %s119 = sand.u32 %s27, 1
          %s120 = smul.addr %s119, 8
          %s121 = scalar_lea.vmem [#allocation2], %s120
          %s123 = ssub.s32 128, 128
          %124 = vsyncadd %s118, %s123
          %s125 = smul.addr %s17, 2
          %s126 = smul.addr %s125, 64
          %s127 = scalar_lea.hbm %s0, %s126
          %s129 = sshll.u32 %s121, 4
          %s130 = int_to_ptr.vmem [resolvable:$true] %s129
          %132 = dma.hbm_to_vmem [thread:$0]  %s127, 128, %s130, %s118
        $region20: #{tpu_custom_call.1} parent=15 // pred_fallthru
          _
        // Predicated region
        $region21: #{tpu_custom_call.1} parent=15 // pred_check
          %p133 = pneg %p63
        $region22: #{tpu_custom_call.1} parent=15 // pred_check_branch
          %135 = sbr.rel (%p133) target = $region24
        $region23: #{tpu_custom_call.1} parent=15 // pred_region
          %s136 = sand.u32 %s53, 1
          %s137 = scalar_lea.sflag [#allocation6], %s136
          %s138 = sand.u32 %s53, 1
          %s139 = smul.addr %s138, 4
          %s140 = scalar_lea.vmem [#allocation5], %s139
          %s142 = ssub.s32 64, 64
          %143 = vsyncadd %s137, %s142
          %s144 = smul.addr %s17, 64
          %s145 = scalar_lea.hbm %s1, %s144
          %s147 = sshll.u32 %s140, 4
          %s148 = int_to_ptr.vmem [resolvable:$true] %s147
          %150 = dma.hbm_to_vmem [thread:$0]  %s145, 64, %s148, %s137
        $region24: #{tpu_custom_call.1} parent=15 // pred_fallthru
          _
      $region16: #{tpu_custom_call.1} parent=5 // pred_fallthru
        _
      %p151 = scmp.le.s32.totalorder 1, %s17
      %p152 = scmp.lt.s32.totalorder %s17, 3
      %p153 = pnand %p151, %p152
      %p154 = pneg %p153
      // Predicated region
      $region25: #{tpu_custom_call.1} parent=5 // pred_check
        _
      $region26: #{tpu_custom_call.1} parent=5 // pred_check_branch
        %156 = sbr.rel (%p153) target = $region28
      $region27: #{tpu_custom_call.1} parent=5 // pred_region
        %s157 = ssub.s32 %s17, 1
        %s158 = sand.u32 %s30, 1
        %s159 = scalar_lea.sflag [#allocation3], %s158
        %s160 = sand.u32 %s30, 1
        %s161 = smul.addr %s160, 8
        %s162 = scalar_lea.vmem [#allocation2], %s161
        // Predicated region
        $region29: #{tpu_custom_call.1} parent=27 // pred_check
          %p163 = pneg %p43
        $region30: #{tpu_custom_call.1} parent=27 // pred_check_branch
          %165 = sbr.rel (%p163) target = $region32
        $region31: #{tpu_custom_call.1} parent=27 // pred_region
          %166 = dma.done %s159, 128
        $region32: #{tpu_custom_call.1} parent=27 // pred_fallthru
          _
        %s167 = sand.u32 %s56, 1
        %s168 = scalar_lea.sflag [#allocation6], %s167
        %s169 = sand.u32 %s56, 1
        %s170 = smul.addr %s169, 4
        %s171 = scalar_lea.vmem [#allocation5], %s170
        // Predicated region
        $region33: #{tpu_custom_call.1} parent=27 // pred_check
          %p172 = pneg %p69
        $region34: #{tpu_custom_call.1} parent=27 // pred_check_branch
          %174 = sbr.rel (%p172) target = $region36
        $region35: #{tpu_custom_call.1} parent=27 // pred_region
          %175 = dma.done %s168, 64
        $region36: #{tpu_custom_call.1} parent=27 // pred_fallthru
          _
        %s176 = sand.u32 %s30, 1
        %s177 = scalar_lea.sflag [#allocation3], %s176
        %s178 = sand.u32 %s30, 1
        %s179 = smul.addr %s178, 8
        %s180 = scalar_lea.vmem [#allocation2], %s179
        %p181 = pneg %p43
        %p182 = pneg %p40
        %s183 = sand.u32 %s56, 1
        %s184 = scalar_lea.sflag [#allocation6], %s183
        %s185 = sand.u32 %s56, 1
        %s186 = smul.addr %s185, 4
        %s187 = scalar_lea.vmem [#allocation5], %s186
        %p188 = pneg %p69
        %p189 = pneg %p66
        %p190 = pneg %p95
        %p191 = pneg %p92
        %s192 = sand.u32 %s82, 1
        %s193 = scalar_lea.sflag [#allocation4], %s192
        %s194 = sand.u32 %s82, 1
        %s195 = smul.addr %s194, 8
        %s196 = scalar_lea.vmem [#allocation7], %s195
        %v197 = vld [vmem:[%s162] sm:$0xff]
        %v199 = vcombine.high %v197, %v197
        %vm201 = vcmask 1043456
        %v202 = vsel %vm201, %v197, 0.0
        %v203 = vsel %vm201, %v199, 0.0
        %v204 = vadd.f32 %v202, %v203
        %205 = vadd.xlane.f32.xlu0 %v204
        %v206 = vpop.xlane.xlu0 %205
        %v207 = vmul.f32 %v206, 0.00390625
        %v210 = vunpack.c.l.s4 839922192
        %v211 = vunpack.c.0.s8 %v210
        %v212 = vlaneseq
        %v213 = vshrl.u32 %v212, 7
        %v214 = vsub.s32 %v211, %v213
        %v215 = vrot.slane %v207, %v214
        %v217 = vsub.f32 %v197, %v215
        %v218 = vmul.f32 %v217, %v217
        %v220 = vcombine.high %v218, %v218
        %v222 = vsel %vm201, %v218, 0.0
        %v223 = vsel %vm201, %v220, 0.0
        %v224 = vadd.f32 %v222, %v223
        %225 = vadd.xlane.f32.xlu0 %v224
        %v226 = vpop.xlane.xlu0 %225
        %v227 = vmul.f32 %v226, 0.003921569
        %v228 = vadd.f32 %v227, 1e-05
        %v229 = vrsqrt.pop %v228
        %vm230 = vcmask 3072
        %v231 = vsel %vm230, %v206, 0.0
        %232 = vadd.xlane.f32.xlu0 %v231
        %v233 = vpop.xlane.xlu0 %232
        %v234 = vrot.slane %v233, 4
        %v235 = vadd.f32 %v233, %v234
        %v236 = vrot.slane %v235, 2
        %v237 = vadd.f32 %v235, %v236
        %v238 = vrot.slane %v237, 1
        %v239 = vadd.f32 %v237, %v238
        %s240 = vtos %v239
        %s241 = smul.f32 %s240, 0.0009765625
        %v242 = vstv %s241
        %v243 = vsub.f32 %v207, %v242
        %v244 = vsel %vm230, %v226, 0.0
        %245 = vadd.xlane.f32.xlu0 %v244
        %v246 = vpop.xlane.xlu0 %245
        %v247 = vrot.slane %v246, 4
        %v248 = vadd.f32 %v246, %v247
        %v249 = vrot.slane %v248, 2
        %v250 = vadd.f32 %v248, %v249
        %v251 = vrot.slane %v250, 1
        %v252 = vadd.f32 %v250, %v251
        %s253 = vtos %v252
        %v254 = vmul.f32 %v243, %v243
        %v255 = vsel %vm230, %v254, 0.0
        %256 = vadd.xlane.f32.xlu0 %v255
        %v257 = vpop.xlane.xlu0 %256
        %v258 = vrot.slane %v257, 4
        %v259 = vadd.f32 %v257, %v258
        %v260 = vrot.slane %v259, 2
        %v261 = vadd.f32 %v259, %v260
        %v262 = vrot.slane %v261, 1
        %v263 = vadd.f32 %v261, %v262
        %s264 = vtos %v263
        %s265 = smul.f32 %s264, 256.0
        %s266 = sadd.f32 %s253, %s265
        %s267 = smul.f32 %s266, 0.0009775171
        %s268 = sadd.f32 %s267, 1e-05
        %v269 = vstv %s268
        %v270 = vrsqrt.pop %v269
        %s271 = vtos %v270
        %v272 = vld [vmem:[%s171] sm:$0xf]
        %v273 = vmul.f32 %v272, %v229
        %v274 = vstv %s271
        %v275 = vmul.f32 %v272, %v274
        %277 = vrot.lane.b32.xlu0 %v275, 127
        %v278 = vpop.permute.xlu0 %277
        %v280 = vadd.f32 %v273, %v278
        %282 = vrot.lane.b32.xlu0 %v280, 126
        %v283 = vpop.permute.xlu0 %282
        %v285 = vmul.f32 %v272, %v283
        %v286 = vmul.f32 %v273, %v207
        %v287 = vmul.f32 %v275, %v242
        %289 = vrot.lane.b32.xlu0 %v287, 127
        %v290 = vpop.permute.xlu0 %289
        %v292 = vadd.f32 %v286, %v290
        %294 = vrot.lane.b32.xlu0 %v292, 126
        %v295 = vpop.permute.xlu0 %294
        %v297 = vmul.f32 %v272, %v295
        %299 = vrot.lane.b32.xlu0 %v297, 1
        %v300 = vpop.permute.xlu0 %299
        %v302 = vsub.f32 %v272, %v300
        %304 = vset.pattern.permute.xlu0 0
        %305 = vperm.xlu0 %304, %v285
        %v306 = vpop.permute.xlu0 %305
        %v308 = vunpack.c.l.s4 839922192
        %v309 = vunpack.c.0.s8 %v308
        %v310 = vlaneseq
        %v311 = vshrl.u32 %v310, 7
        %v312 = vsub.s32 %v309, %v311
        %v313 = vrot.slane %v306, %v312
        %v315 = vmul.f32 %v197, %v313
        %317 = vset.pattern.permute.xlu0 1
        %318 = vperm.xlu0 %317, %v302
        %v319 = vpop.permute.xlu0 %318
        %v321 = vunpack.c.l.s4 839922192
        %v322 = vunpack.c.0.s8 %v321
        %v323 = vlaneseq
        %v324 = vshrl.u32 %v323, 7
        %v325 = vsub.s32 %v322, %v324
        %v326 = vrot.slane %v319, %v325
        %v328 = vadd.f32 %v315, %v326
        %329 = vst [vmem:[%s196] sm:$0xff] %v328
        %s330 = sand.u32 %s82, 1
        %s331 = scalar_lea.sflag [#allocation4], %s330
        %s332 = sand.u32 %s82, 1
        %s333 = smul.addr %s332, 8
        %s334 = scalar_lea.vmem [#allocation7], %s333
        // Predicated region
        $region37: #{tpu_custom_call.1} parent=27 // pred_check
          %p335 = pneg %p92
        $region38: #{tpu_custom_call.1} parent=27 // pred_check_branch
          %337 = sbr.rel (%p335) target = $region40
        $region39: #{tpu_custom_call.1} parent=27 // pred_region
          %s339 = ssub.s32 128, 128
          %340 = vsyncadd %s331, %s339
          %s341 = smul.addr %s22, 2
          %s342 = smul.addr %s341, 64
          %s343 = scalar_lea.hbm %s2, %s342
          %s345 = sshll.u32 %s334, 4
          %s346 = int_to_ptr.vmem [resolvable:$true] %s345
          %348 = dma.vmem_to_hbm [thread:$0]  %s346, 128, %s343, %s331
        $region40: #{tpu_custom_call.1} parent=27 // pred_fallthru
          _
      $region28: #{tpu_custom_call.1} parent=5 // pred_fallthru
        _
      %p349 = scmp.le.s32.totalorder 2, %s17
      // Predicated region
      $region41: #{tpu_custom_call.1} parent=5 // pred_check
        %p350 = pneg %p349
      $region42: #{tpu_custom_call.1} parent=5 // pred_check_branch
        %352 = sbr.rel (%p350) target = $region44
      $region43: #{tpu_custom_call.1} parent=5 // pred_region
        %s353 = ssub.s32 %s17, 2
        // Predicated region
        $region45: #{tpu_custom_call.1} parent=43 // pred_check
          %p354 = pneg %p98
        $region46: #{tpu_custom_call.1} parent=43 // pred_check_branch
          %356 = sbr.rel (%p354) target = $region48
        $region47: #{tpu_custom_call.1} parent=43 // pred_region
          %s357 = sand.u32 %s83, 1
          %s358 = scalar_lea.sflag [#allocation4], %s357
          %s359 = sand.u32 %s83, 1
          %s360 = smul.addr %s359, 8
          %s361 = scalar_lea.vmem [#allocation7], %s360
          %362 = dma.done %s358, 128
        $region48: #{tpu_custom_call.1} parent=43 // pred_fallthru
          _
      $region44: #{tpu_custom_call.1} parent=5 // pred_fallthru
        _
    $region6: #{tpu_custom_call.1} parent=1 // loop_footer
      %s21 = sadd.s32 1, %s17
    $region7: #{tpu_custom_call.1} parent=1 // loop_footer_branch
      %16 = sbr.rel target = $region3
    $region8: #{tpu_custom_call.1} parent=1 // loop_exit
      _
    %363 = vsyncpa [#allocation3], 1
    %s364 = scalar_lea.sflag [#allocation3], 1
    %365 = vsyncpa %s364, 1
    %366 = vsyncpa [#allocation6], 1
    %s367 = scalar_lea.sflag [#allocation6], 1
    %368 = vsyncpa %s367, 1
    %369 = vsyncpa [#allocation4], 1
    %s370 = scalar_lea.sflag [#allocation4], 1
    %371 = vsyncpa %s370, 1

</llo_original>
